<compile_context>
chip_gen: v6e
topology: v6e:2x2x1
jax: 0.10.0
libtpu: 0.0.40
codegen_flags: <defaults>
</compile_context>

<pallas_src>
import functools
import math

import numpy as np
import jax
import jax.numpy as jnp
from jax.experimental import pallas as pl
from jax.experimental.pallas import tpu as pltpu

_SQRT2_INV = 1.0 / math.sqrt(2.0)


def _upconv_kernel(x_ref, w_ref, g_ref, b_ref, o_ref, act_ref, *,
                   K, T, T_pool, stride, scale, left, C_in, C_out, eps):
    # x_ref:  (1, T, C_in)          one batch element, channels-last, bf16
    # w_ref:  (K*C_in, C_out)       conv taps as a single im2col weight, bf16
    # g_ref:  (1, C_out)            layernorm gamma (f32)
    # b_ref:  (1, C_out)            layernorm beta  (f32)
    # o_ref:  (1, scale, T_pool, C_out)  output, phase-major (f32)
    # act_ref: VMEM scratch (T, C_out) f32 (staging for the strided maxpool read)
    x = x_ref[0]                                           # (T, C_in)

    # --- Conv1d (padding='same', stride=1) as ONE im2col matmul.
    # The K-1 halo is built in-kernel with static slices + zero rows, so the
    # wrapper never materialises a padded copy of x in HBM.
    cols = []
    for j in range(K):
        off = j - left
        if off == 0:
            shifted = x
        elif off > 0:
            shifted = jnp.concatenate(
                [x[off:, :], jnp.zeros((off, C_in), x.dtype)], axis=0)
        else:
            shifted = jnp.concatenate(
                [jnp.zeros((-off, C_in), x.dtype), x[:T + off, :]], axis=0)
        cols.append(shifted)
    xcol = jnp.concatenate(cols, axis=-1)                  # (T, K*C_in) bf16

    y = jnp.dot(xcol, w_ref[...],
                preferred_element_type=jnp.float32)        # (T, C_out) f32

    # --- LayerNorm over the channel (lane) axis, f32
    mean = jnp.mean(y, axis=-1, keepdims=True)
    cent = y - mean
    var = jnp.mean(cent * cent, axis=-1, keepdims=True)
    y = cent * jax.lax.rsqrt(var + eps)
    y = y * g_ref[...] + b_ref[...]

    # --- GELU (exact / erf, matches torch.nn.GELU default)
    y = 0.5 * y * (1.0 + jax.lax.erf(y * _SQRT2_INV))

    # --- Dropout: identity in eval mode.

    # --- MaxPool1d(kernel_size=stride, stride=stride)
    if stride == 1:
        pooled = y                                         # (T_pool, C_out)
    else:
        act_ref[...] = y
        pooled = act_ref[pl.ds(0, T_pool, stride=stride), :]
        for r in range(1, stride):
            pooled = jnp.maximum(pooled,
                                 act_ref[pl.ds(r, T_pool, stride=stride), :])

    # --- Upsample(mode='linear', align_corners=False), integer scale factor.
    # Direct 2-tap interpolation (no dense matrix):
    #   out[scale*j + r] = w_lo(r)*pooled[lo] + w_hi(r)*pooled[hi]
    # with clamped +/-1 shifted copies handling the edge clamping exactly.
    if T_pool > 1:
        p_prev = jnp.concatenate([pooled[:1, :], pooled[:-1, :]], axis=0)
        p_next = jnp.concatenate([pooled[1:, :], pooled[-1:, :]], axis=0)
    else:
        p_prev = pooled
        p_next = pooled

    for r in range(scale):
        frac = (r + 0.5) / scale - 0.5                     # static python float
        if frac >= 0.0:
            out_r = (1.0 - frac) * pooled + frac * p_next
        else:
            out_r = (-frac) * p_prev + (1.0 + frac) * pooled
        o_ref[0, r, :, :] = out_r


def build_upsample_matrix(t_in, t_out, scale):
    """[t_out, t_in] matrix reproducing nn.Upsample(scale, 'linear',
    align_corners=False).  Used only by the plain-JAX reference."""
    ratio = 1.0 / float(scale)
    i = np.arange(t_out, dtype=np.float64)
    src = ratio * (i + 0.5) - 0.5
    src = np.maximum(src, 0.0)
    lo = np.minimum(np.floor(src).astype(np.int64), t_in - 1)
    hi = np.minimum(lo + 1, t_in - 1)
    w_hi = src - lo
    w_lo = 1.0 - w_hi
    m = np.zeros((t_out, t_in), dtype=np.float32)
    m[np.arange(t_out), lo] += w_lo.astype(np.float32)
    m[np.arange(t_out), hi] += w_hi.astype(np.float32)
    return jnp.asarray(m)


def upconv_block_forward(x, conv_w, gamma, beta, *, kernel_size, stride, scale,
                         eps=1e-5, mxu_dtype=jnp.bfloat16):
    """x: [B, C_in, T] (NCT). conv_w: [C_out, C_in, K]. Returns [B, C_out, T_up]."""
    B, C_in, T = x.shape
    C_out = conv_w.shape[0]
    K = kernel_size
    left = (K - 1) // 2                    # PyTorch 'same' padding split
    T_pool = T // stride
    scale_i = int(scale)
    assert scale_i == scale and scale_i >= 1, "integer scale_factor required"
    T_up = T_pool * scale_i                # == floor(T_pool * scale)

    # Channels-last input, bf16 MXU operand (f32 accumulation in-kernel).
    x_t = jnp.transpose(x, (0, 2, 1)).astype(mxu_dtype)              # [B, T, C_in]
    # im2col weight: row index = tap*C_in + c_in  (matches kernel concat order)
    w2 = jnp.transpose(conv_w, (2, 1, 0)).reshape(K * C_in, C_out)   # [K*C_in, C_out]
    w2 = w2.astype(mxu_dtype)
    gamma2 = gamma.reshape(1, C_out).astype(jnp.float32)
    beta2 = beta.reshape(1, C_out).astype(jnp.float32)

    kernel = functools.partial(_upconv_kernel, K=K, T=T, T_pool=T_pool,
                               stride=stride, scale=scale_i, left=left,
                               C_in=C_in, C_out=C_out, eps=eps)

    out4 = pl.pallas_call(
        kernel,
        out_shape=jax.ShapeDtypeStruct((B, scale_i, T_pool, C_out), jnp.float32),
        grid=(B,),
        in_specs=[
            pl.BlockSpec((1, T, C_in), lambda b: (b, 0, 0)),
            pl.BlockSpec((K * C_in, C_out), lambda b: (0, 0)),
            pl.BlockSpec((1, C_out), lambda b: (0, 0)),
            pl.BlockSpec((1, C_out), lambda b: (0, 0)),
        ],
        out_specs=pl.BlockSpec((1, scale_i, T_pool, C_out),
                               lambda b: (b, 0, 0, 0)),
        scratch_shapes=[pltpu.VMEM((T, C_out), jnp.float32)],
        compiler_params=pltpu.CompilerParams(
            dimension_semantics=("parallel",)),
    )(x_t, w2, gamma2, beta2)

    # out4[b, r, j, c] is output time index scale*j + r  ->  NCT
    out = jnp.transpose(out4, (0, 3, 2, 1)).reshape(B, C_out, T_up)
    return out


def _reference(x, conv_w, gamma, beta, *, kernel_size, stride, scale,
               eps=1e-5, mxu_dtype=jnp.bfloat16):
    """Plain-JAX reference (independent code path).  The MXU operands are
    quantized through the same dtype as the kernel so the comparison isolates
    kernel arithmetic rather than the intentional bf16 input rounding."""
    B, C_in, T = x.shape
    C_out = conv_w.shape[0]
    K = kernel_size
    left = (K - 1) // 2
    right = (K - 1) - left
    x_q = x.astype(mxu_dtype).astype(jnp.float32)
    w_q = conv_w.astype(mxu_dtype).astype(jnp.float32)
    x_pad = jnp.pad(x_q, ((0, 0), (0, 0), (left, right)))
    y = jax.lax.conv_general_dilated(
        x_pad, w_q, window_strides=(1,), padding="VALID",
        dimension_numbers=("NCH", "OIH", "NCH"),
        precision=jax.lax.Precision.HIGHEST)
    yt = jnp.transpose(y, (0, 2, 1))
    mean = yt.mean(-1, keepdims=True)
    var = ((yt - mean) ** 2).mean(-1, keepdims=True)
    yt = (yt - mean) / jnp.sqrt(var + eps) * gamma + beta
    y = jnp.transpose(yt, (0, 2, 1))
    y = jax.nn.gelu(y, approximate=False)
    T_pool = T // stride
    y = y[:, :, :T_pool * stride].reshape(B, C_out, T_pool, stride).max(-1)
    T_up = int(math.floor(T_pool * scale))
    up = build_upsample_matrix(T_pool, T_up, scale)
    return jnp.einsum("bct,ut->bcu", y, up,
                      precision=jax.lax.Precision.HIGHEST)


if __name__ == "__main__":
    # Small, module-consistent shapes: [batch, emb(channels), time]
    B, C_in, T = 2, 4, 16
    C_out, K, stride, scale = 8, 3, 2, 2

    key = jax.random.PRNGKey(0)
    k1, k2, k3, k4 = jax.random.split(key, 4)
    x = jax.random.normal(k1, (B, C_in, T), jnp.float32)
    conv_w = 0.3 * jax.random.normal(k2, (C_out, C_in, K), jnp.float32)
    gamma = 1.0 + 0.1 * jax.random.normal(k3, (C_out,), jnp.float32)
    beta = 0.1 * jax.random.normal(k4, (C_out,), jnp.float32)

    out = upconv_block_forward(x, conv_w, gamma, beta,
                               kernel_size=K, stride=stride, scale=scale)
    out = jax.block_until_ready(out)

    ref = _reference(x, conv_w, gamma, beta,
                     kernel_size=K, stride=stride, scale=scale)
    assert out.shape == (B, C_out, (T // stride) * scale), out.shape
    np.testing.assert_allclose(np.asarray(out), np.asarray(ref),
                               atol=2e-3, rtol=2e-3)
    print("KERNEL_OK")
</pallas_src>

<mosaic_0001>
module attributes {stable_mosaic.version = 11 : i64} {
  func.func @_upconv_kernel(%arg0: i32, %arg1: memref<1x16x4xbf16, #tpu.memory_space<vmem>>, %arg2: memref<12x8xbf16, #tpu.memory_space<vmem>>, %arg3: memref<1x8xf32, #tpu.memory_space<vmem>>, %arg4: memref<1x8xf32, #tpu.memory_space<vmem>>, %arg5: memref<1x2x8x8xf32, #tpu.memory_space<vmem>>, %arg6: memref<16x8xf32, #tpu.memory_space<vmem>>) attributes {dimension_semantics = [#tpu.dimension_semantics<parallel>], iteration_bounds = array<i64: 2>, scalar_prefetch = 0 : i64, scratch_operands = 1 : i64, tpu.core_type = #tpu.core_type<tc>, window_params = [{transform_indices = @transform_0, window_bounds = array<i64: 1, 16, 4>}, {pipeline_mode = #tpu.pipeline_mode<synchronous>, transform_indices = @transform_1, window_bounds = array<i64: 12, 8>}, {pipeline_mode = #tpu.pipeline_mode<synchronous>, transform_indices = @transform_2, window_bounds = array<i64: 1, 8>}, {pipeline_mode = #tpu.pipeline_mode<synchronous>, transform_indices = @transform_3, window_bounds = array<i64: 1, 8>}, {transform_indices = @transform_4, window_bounds = array<i64: 1, 2, 8, 8>}]} {
    %c0 = arith.constant 0 : index
    %c0_0 = arith.constant 0 : index
    %c0_1 = arith.constant 0 : index
    %0 = vector.load %arg1[%c0, %c0_0, %c0_1] : memref<1x16x4xbf16, #tpu.memory_space<vmem>>, vector<1x16x4xbf16>
    %1 = vector.shape_cast %0 : vector<1x16x4xbf16> to vector<16x4xbf16>
    %cst = arith.constant 0.000000e+00 : bf16
    %2 = vector.broadcast %cst : bf16 to vector<1x4xbf16>
    %3 = vector.extract_strided_slice %1 {offsets = [0, 0], sizes = [15, 4], strides = [1, 1]} : vector<16x4xbf16> to vector<15x4xbf16>
    %4 = tpu.concatenate %2, %3 in 0 : vector<1x4xbf16>, vector<15x4xbf16> -> vector<16x4xbf16>
    %5 = vector.extract_strided_slice %1 {offsets = [1, 0], sizes = [15, 4], strides = [1, 1]} : vector<16x4xbf16> to vector<15x4xbf16>
    %cst_2 = arith.constant 0.000000e+00 : bf16
    %6 = vector.broadcast %cst_2 : bf16 to vector<1x4xbf16>
    %7 = tpu.concatenate %5, %6 in 0 : vector<15x4xbf16>, vector<1x4xbf16> -> vector<16x4xbf16>
    %8 = tpu.concatenate %4, %1, %7 in 1 : vector<16x4xbf16>, vector<16x4xbf16>, vector<16x4xbf16> -> vector<16x12xbf16>
    %c0_3 = arith.constant 0 : index
    %c0_4 = arith.constant 0 : index
    %9 = vector.load %arg2[%c0_3, %c0_4] : memref<12x8xbf16, #tpu.memory_space<vmem>>, vector<12x8xbf16>
    %cst_5 = arith.constant dense<0.000000e+00> : vector<16x8xf32>
    %10 = tpu.matmul %8, %9, %cst_5 {dimension_numbers = #tpu.dot_dimension_numbers<[1], [0], [0], [1], [0, 0, 1, 1], [], []>} : vector<16x12xbf16>, vector<12x8xbf16>, vector<16x8xf32> -> vector<16x8xf32>
    %cst_6 = arith.constant dense<0.000000e+00> : vector<16xf32>
    %11 = vector.multi_reduction <add>, %10, %cst_6 [1] : vector<16x8xf32> to vector<16xf32>
    %12 = vector.shape_cast %11 : vector<16xf32> to vector<16x1xf32>
    %cst_7 = arith.constant 8.000000e+00 : f32
    %13 = vector.broadcast %cst_7 : f32 to vector<16x1xf32>
    %14 = arith.divf %12, %13 : vector<16x1xf32>
    %15 = vector.broadcast %14 : vector<16x1xf32> to vector<16x8xf32>
    %16 = arith.subf %10, %15 : vector<16x8xf32>
    %17 = arith.mulf %16, %16 : vector<16x8xf32>
    %cst_8 = arith.constant dense<0.000000e+00> : vector<16xf32>
    %18 = vector.multi_reduction <add>, %17, %cst_8 [1] : vector<16x8xf32> to vector<16xf32>
    %19 = vector.shape_cast %18 : vector<16xf32> to vector<16x1xf32>
    %cst_9 = arith.constant 8.000000e+00 : f32
    %20 = vector.broadcast %cst_9 : f32 to vector<16x1xf32>
    %21 = arith.divf %19, %20 : vector<16x1xf32>
    %cst_10 = arith.constant 9.99999974E-6 : f32
    %22 = vector.broadcast %cst_10 : f32 to vector<16x1xf32>
    %23 = arith.addf %21, %22 : vector<16x1xf32>
    %24 = math.rsqrt %23 : vector<16x1xf32>
    %25 = vector.broadcast %24 : vector<16x1xf32> to vector<16x8xf32>
    %26 = arith.mulf %16, %25 : vector<16x8xf32>
    %c0_11 = arith.constant 0 : index
    %c0_12 = arith.constant 0 : index
    %27 = vector.load %arg3[%c0_11, %c0_12] : memref<1x8xf32, #tpu.memory_space<vmem>>, vector<1x8xf32>
    %28 = vector.broadcast %27 : vector<1x8xf32> to vector<16x8xf32>
    %29 = arith.mulf %26, %28 : vector<16x8xf32>
    %c0_13 = arith.constant 0 : index
    %c0_14 = arith.constant 0 : index
    %30 = vector.load %arg4[%c0_13, %c0_14] : memref<1x8xf32, #tpu.memory_space<vmem>>, vector<1x8xf32>
    %31 = vector.broadcast %30 : vector<1x8xf32> to vector<16x8xf32>
    %32 = arith.addf %29, %31 : vector<16x8xf32>
    %cst_15 = arith.constant 5.000000e-01 : f32
    %33 = vector.broadcast %cst_15 : f32 to vector<16x8xf32>
    %34 = arith.mulf %33, %32 : vector<16x8xf32>
    %cst_16 = arith.constant 0.707106769 : f32
    %35 = vector.broadcast %cst_16 : f32 to vector<16x8xf32>
    %36 = arith.mulf %32, %35 : vector<16x8xf32>
    %37 = math.erf %36 : vector<16x8xf32>
    %cst_17 = arith.constant 1.000000e+00 : f32
    %38 = vector.broadcast %cst_17 : f32 to vector<16x8xf32>
    %39 = arith.addf %38, %37 : vector<16x8xf32>
    %40 = arith.mulf %34, %39 : vector<16x8xf32>
    %c0_18 = arith.constant 0 : index
    %c0_19 = arith.constant 0 : index
    %41 = vector.load %arg6[%c0_18, %c0_19] : memref<16x8xf32, #tpu.memory_space<vmem>>, vector<16x8xf32>
    tpu.vector_store %arg6[%c0_18, %c0_19], %40 {strides = array<i32>} : memref<16x8xf32, #tpu.memory_space<vmem>>, vector<16x8xf32>,
    %c0_20 = arith.constant 0 : index
    %c0_21 = arith.constant 0 : index
    %42 = tpu.strided_load %arg6[%c0_20, %c0_21] {strides = array<i32: 2, 1>} : memref<16x8xf32, #tpu.memory_space<vmem>>, vector<8x8xf32>
    %c1 = arith.constant 1 : index
    %c0_22 = arith.constant 0 : index
    %43 = tpu.strided_load %arg6[%c1, %c0_22] {strides = array<i32: 2, 1>} : memref<16x8xf32, #tpu.memory_space<vmem>>, vector<8x8xf32>
    %44 = arith.maximumf %42, %43 : vector<8x8xf32>
    %45 = vector.extract_strided_slice %44 {offsets = [0, 0], sizes = [1, 8], strides = [1, 1]} : vector<8x8xf32> to vector<1x8xf32>
    %46 = vector.extract_strided_slice %44 {offsets = [0, 0], sizes = [7, 8], strides = [1, 1]} : vector<8x8xf32> to vector<7x8xf32>
    %47 = tpu.concatenate %45, %46 in 0 : vector<1x8xf32>, vector<7x8xf32> -> vector<8x8xf32>
    %48 = vector.extract_strided_slice %44 {offsets = [1, 0], sizes = [7, 8], strides = [1, 1]} : vector<8x8xf32> to vector<7x8xf32>
    %49 = vector.extract_strided_slice %44 {offsets = [7, 0], sizes = [1, 8], strides = [1, 1]} : vector<8x8xf32> to vector<1x8xf32>
    %50 = tpu.concatenate %48, %49 in 0 : vector<7x8xf32>, vector<1x8xf32> -> vector<8x8xf32>
    %cst_23 = arith.constant 2.500000e-01 : f32
    %51 = vector.broadcast %cst_23 : f32 to vector<8x8xf32>
    %52 = arith.mulf %51, %47 : vector<8x8xf32>
    %cst_24 = arith.constant 7.500000e-01 : f32
    %53 = vector.broadcast %cst_24 : f32 to vector<8x8xf32>
    %54 = arith.mulf %53, %44 : vector<8x8xf32>
    %55 = arith.addf %52, %54 : vector<8x8xf32>
    %c0_25 = arith.constant 0 : index
    %c0_26 = arith.constant 0 : index
    %c0_27 = arith.constant 0 : index
    %c0_28 = arith.constant 0 : index
    %56 = vector.load %arg5[%c0_25, %c0_26, %c0_27, %c0_28] : memref<1x2x8x8xf32, #tpu.memory_space<vmem>>, vector<1x1x8x8xf32>
    %57 = vector.shape_cast %56 : vector<1x1x8x8xf32> to vector<8x8xf32>
    %58 = vector.shape_cast %55 : vector<8x8xf32> to vector<1x1x8x8xf32>
    tpu.vector_store %arg5[%c0_25, %c0_26, %c0_27, %c0_28], %58 {strides = array<i32>} : memref<1x2x8x8xf32, #tpu.memory_space<vmem>>, vector<1x1x8x8xf32>,
    %cst_29 = arith.constant 7.500000e-01 : f32
    %59 = vector.broadcast %cst_29 : f32 to vector<8x8xf32>
    %60 = arith.mulf %59, %44 : vector<8x8xf32>
    %cst_30 = arith.constant 2.500000e-01 : f32
    %61 = vector.broadcast %cst_30 : f32 to vector<8x8xf32>
    %62 = arith.mulf %61, %50 : vector<8x8xf32>
    %63 = arith.addf %60, %62 : vector<8x8xf32>
    %c0_31 = arith.constant 0 : index
    %c1_32 = arith.constant 1 : index
    %c0_33 = arith.constant 0 : index
    %c0_34 = arith.constant 0 : index
    %64 = vector.load %arg5[%c0_31, %c1_32, %c0_33, %c0_34] : memref<1x2x8x8xf32, #tpu.memory_space<vmem>>, vector<1x1x8x8xf32>
    %65 = vector.shape_cast %64 : vector<1x1x8x8xf32> to vector<8x8xf32>
    %66 = vector.shape_cast %63 : vector<8x8xf32> to vector<1x1x8x8xf32>
    tpu.vector_store %arg5[%c0_31, %c1_32, %c0_33, %c0_34], %66 {strides = array<i32>} : memref<1x2x8x8xf32, #tpu.memory_space<vmem>>, vector<1x1x8x8xf32>,
    return
  }
  func.func @transform_0(%arg0: i32) -> (i32, i32, i32) {
    %c0_i32 = arith.constant 0 : i32
    %c0_i32_0 = arith.constant 0 : i32
    %c0_i32_1 = arith.constant 0 : i32
    return %arg0, %c0_i32, %c0_i32_0 : i32, i32, i32
  }
  func.func @transform_1(%arg0: i32) -> (i32, i32) {
    %c0_i32 = arith.constant 0 : i32
    %c0_i32_0 = arith.constant 0 : i32
    %c0_i32_1 = arith.constant 0 : i32
    return %c0_i32, %c0_i32_0 : i32, i32
  }
  func.func @transform_2(%arg0: i32) -> (i32, i32) {
    %c0_i32 = arith.constant 0 : i32
    %c0_i32_0 = arith.constant 0 : i32
    %c0_i32_1 = arith.constant 0 : i32
    return %c0_i32, %c0_i32_0 : i32, i32
  }
  func.func @transform_3(%arg0: i32) -> (i32, i32) {
    %c0_i32 = arith.constant 0 : i32
    %c0_i32_0 = arith.constant 0 : i32
    %c0_i32_1 = arith.constant 0 : i32
    return %c0_i32, %c0_i32_0 : i32, i32
  }
  func.func @transform_4(%arg0: i32) -> (i32, i32, i32, i32) {
    %c0_i32 = arith.constant 0 : i32
    %c0_i32_0 = arith.constant 0 : i32
    %c0_i32_1 = arith.constant 0 : i32
    %c0_i32_2 = arith.constant 0 : i32
    return %arg0, %c0_i32, %c0_i32_0, %c0_i32_1 : i32, i32, i32, i32
  }
}

</mosaic_0001>

<llo_original>
// kernel: tpu_custom_call.1
$region0: #{tpu_custom_call.1}
  #allocation0 [shape = 'u32[]', space=smem, size = 0x4, offset = 0x4, fixed_abs, tag = 'smem constant byte address 0x4 - core index']
  #allocation1 [shape = 'u32[144,128]{1,0:T(1,128)}', space=vmem, size = 0x12000, scoped, tag = 'internal scratch']
  #allocation2 [shape = 'f32[16,8]{1,0:T(8,128)}', space=vmem, size = 0x2000, scoped, tag = 'scratch operand']
  %s0 = inlined_call_operand.vmem [shape: bf16[2,16,4], index: 0, kind: input, shape index: {}]
  %s1 = inlined_call_operand.vmem [shape: bf16[12,8], index: 1, kind: input, shape index: {}]
  %s2 = inlined_call_operand.vmem [shape: f32[1,8], index: 2, kind: input, shape index: {}]
  %s3 = inlined_call_operand.vmem [shape: f32[1,8], index: 3, kind: input, shape index: {}]
  %s4 = inlined_call_operand.hbm [shape: f32[2,2,8,8], index: 4, kind: output, shape index: {}]
  %s5 = sld [smem:[#allocation0]]
  $region49: #{tpu_custom_call.1} parent=0
    _
  %s7 = ssub.s32 1, %s5
  %s8 = scalar_select 0, %s7, %s5
  $region1: #{tpu_custom_call.1} parent=0
    #allocation3 [shape = 'u8[16384]{0}', space=vmem, size = 0x4000, scoped, tag = 'output window, operand 0']
    #allocation4 [shape = 's32[2]{0}', space=sflag, size = 0x8, scoped, tag = 'scoped memory for tpu_custom_call.1']
    %9 = vsyncpa [#allocation4], 0
    %s10 = scalar_lea.sflag [#allocation4], 1
    %11 = vsyncpa %s10, 0
    loop: start=0, step=1, limit=4
    $region2: #{tpu_custom_call.1} parent=1 // loop_pre_header
      _
    $region3: #{tpu_custom_call.1} parent=1 // loop_header
      %s13 = sphi 0, %s17
      %p14 = scmp.ge.s32.totalorder %s13, 4
      %s23 = sphi 0, %s25
      %s26 = sphi 0, %s23
      %s27 = sphi 0, %s26
      %s43 = sphi 0, %s27
      %s47 = sphi 0, %s47
      %s49 = sphi 0, %s47
      %s50 = sphi 0, %s49
      %s64 = sphi 0, %s50
      %s68 = sphi 0, %s68
      %s70 = sphi 0, %s68
      %s71 = sphi 0, %s70
      %s85 = sphi 0, %s71
      %s89 = sphi 0, %s89
      %s91 = sphi 0, %s89
      %s92 = sphi 0, %s91
      %s106 = sphi 0, %s92
      %s112 = sphi 0, %s114
      %s115 = sphi 0, %s112
      %s116 = sphi 0, %s115
      %s132 = sphi 0, %s116
    $region4: #{tpu_custom_call.1} parent=1 // loop_header_branch
      %16 = sbr.rel (%p14) target = $region8
    $region5: #{tpu_custom_call.1} parent=1 // loop_body
      %s18 = ssub.s32 %s13, 1
      %s19 = ssub.s32 %s13, 2
      %s20 = sadd.s32 %s13, 1
      %s21 = ssub.s32 %s13, %s20
      %p22 = scmp.eq.s32.totalorder %s21, 0
      %s24 = sadd.s32 %s23, 1
      %s25 = scalar_select %p22, %s23, %s24
      %p28 = pneg %p22
      %p29 = scmp.eq.s32.totalorder %s13, 1
      %p30 = por %p28, %p29
      %p31 = scmp.ne.s32.totalorder %s23, %s26
      %p32 = scmp.eq.s32.totalorder %s13, 0
      %p33 = por %p31, %p32
      %p34 = scmp.ne.s32.totalorder %s23, %s26
      %p35 = scmp.eq.s32.totalorder %s18, 1
      %p36 = por %p34, %p35
      %p37 = scmp.ne.s32.totalorder %s26, %s27
      %p38 = scmp.eq.s32.totalorder %s18, 0
      %p39 = por %p37, %p38
      %p40 = scmp.ne.s32.totalorder %s26, %s27
      %p41 = scmp.eq.s32.totalorder %s19, 1
      %p42 = por %p40, %p41
      %p44 = scmp.ne.s32.totalorder %s27, %s43
      %p45 = scmp.eq.s32.totalorder %s19, 0
      %p46 = por %p44, %p45
      %s48 = sadd.s32 %s47, 1
      %p51 = scmp.eq.s32.totalorder %s13, 1
      %p52 = scmp.ne.s32.totalorder %s47, %s49
      %p53 = scmp.eq.s32.totalorder %s13, 0
      %p54 = por %p52, %p53
      %p55 = scmp.ne.s32.totalorder %s47, %s49
      %p56 = scmp.eq.s32.totalorder %s18, 1
      %p57 = por %p55, %p56
      %p58 = scmp.ne.s32.totalorder %s49, %s50
      %p59 = scmp.eq.s32.totalorder %s18, 0
      %p60 = por %p58, %p59
      %p61 = scmp.ne.s32.totalorder %s49, %s50
      %p62 = scmp.eq.s32.totalorder %s19, 1
      %p63 = por %p61, %p62
      %p65 = scmp.ne.s32.totalorder %s50, %s64
      %p66 = scmp.eq.s32.totalorder %s19, 0
      %p67 = por %p65, %p66
      %s69 = sadd.s32 %s68, 1
      %p72 = scmp.eq.s32.totalorder %s13, 1
      %p73 = scmp.ne.s32.totalorder %s68, %s70
      %p74 = scmp.eq.s32.totalorder %s13, 0
      %p75 = por %p73, %p74
      %p76 = scmp.ne.s32.totalorder %s68, %s70
      %p77 = scmp.eq.s32.totalorder %s18, 1
      %p78 = por %p76, %p77
      %p79 = scmp.ne.s32.totalorder %s70, %s71
      %p80 = scmp.eq.s32.totalorder %s18, 0
      %p81 = por %p79, %p80
      %p82 = scmp.ne.s32.totalorder %s70, %s71
      %p83 = scmp.eq.s32.totalorder %s19, 1
      %p84 = por %p82, %p83
      %p86 = scmp.ne.s32.totalorder %s71, %s85
      %p87 = scmp.eq.s32.totalorder %s19, 0
      %p88 = por %p86, %p87
      %s90 = sadd.s32 %s89, 1
      %p93 = scmp.eq.s32.totalorder %s13, 1
      %p94 = scmp.ne.s32.totalorder %s89, %s91
      %p95 = scmp.eq.s32.totalorder %s13, 0
      %p96 = por %p94, %p95
      %p97 = scmp.ne.s32.totalorder %s89, %s91
      %p98 = scmp.eq.s32.totalorder %s18, 1
      %p99 = por %p97, %p98
      %p100 = scmp.ne.s32.totalorder %s91, %s92
      %p101 = scmp.eq.s32.totalorder %s18, 0
      %p102 = por %p100, %p101
      %p103 = scmp.ne.s32.totalorder %s91, %s92
      %p104 = scmp.eq.s32.totalorder %s19, 1
      %p105 = por %p103, %p104
      %p107 = scmp.ne.s32.totalorder %s92, %s106
      %p108 = scmp.eq.s32.totalorder %s19, 0
      %p109 = por %p107, %p108
      %s110 = ssub.s32 %s13, %s20
      %p111 = scmp.eq.s32.totalorder %s110, 0
      %s113 = sadd.s32 %s112, 1
      %s114 = scalar_select %p111, %s112, %s113
      %p117 = pneg %p111
      %p118 = scmp.eq.s32.totalorder %s13, 1
      %p119 = por %p117, %p118
      %p120 = scmp.ne.s32.totalorder %s112, %s115
      %p121 = scmp.eq.s32.totalorder %s13, 0
      %p122 = por %p120, %p121
      %p123 = scmp.ne.s32.totalorder %s112, %s115
      %p124 = scmp.eq.s32.totalorder %s18, 1
      %p125 = por %p123, %p124
      %p126 = scmp.ne.s32.totalorder %s115, %s116
      %p127 = scmp.eq.s32.totalorder %s18, 0
      %p128 = por %p126, %p127
      %p129 = scmp.ne.s32.totalorder %s115, %s116
      %p130 = scmp.eq.s32.totalorder %s19, 1
      %p131 = por %p129, %p130
      %p133 = scmp.ne.s32.totalorder %s116, %s132
      %p134 = scmp.eq.s32.totalorder %s19, 0
      %p135 = por %p133, %p134
      %p136 = scmp.le.s32.totalorder 1, %s13
      %p137 = scmp.lt.s32.totalorder %s13, 3
      %p138 = pnand %p136, %p137
      %p139 = pneg %p138
      // Predicated region
      $region9: #{tpu_custom_call.1} parent=5 // pred_check
        _
      $region10: #{tpu_custom_call.1} parent=5 // pred_check_branch
        %141 = sbr.rel (%p138) target = $region12
      $region11: #{tpu_custom_call.1} parent=5 // pred_region
        %s142 = ssub.s32 %s13, 1
        // Predicated region
        $region13: #{tpu_custom_call.1} parent=11 // pred_check
          %p143 = pneg %p60
        $region14: #{tpu_custom_call.1} parent=11 // pred_check_branch
          %145 = sbr.rel (%p143) target = $region16
        $region15: #{tpu_custom_call.1} parent=11 // pred_region
          _
        $region16: #{tpu_custom_call.1} parent=11 // pred_fallthru
          _
        // Predicated region
        $region17: #{tpu_custom_call.1} parent=11 // pred_check
          %p146 = pneg %p81
        $region18: #{tpu_custom_call.1} parent=11 // pred_check_branch
          %148 = sbr.rel (%p146) target = $region20
        $region19: #{tpu_custom_call.1} parent=11 // pred_region
          _
        $region20: #{tpu_custom_call.1} parent=11 // pred_fallthru
          _
        // Predicated region
        $region21: #{tpu_custom_call.1} parent=11 // pred_check
          %p149 = pneg %p102
        $region22: #{tpu_custom_call.1} parent=11 // pred_check_branch
          %151 = sbr.rel (%p149) target = $region24
        $region23: #{tpu_custom_call.1} parent=11 // pred_region
          _
        $region24: #{tpu_custom_call.1} parent=11 // pred_fallthru
          _
      $region12: #{tpu_custom_call.1} parent=5 // pred_fallthru
        _
      %p152 = scmp.lt.s32.totalorder %s13, 2
      // Predicated region
      $region25: #{tpu_custom_call.1} parent=5 // pred_check
        %p153 = pneg %p152
      $region26: #{tpu_custom_call.1} parent=5 // pred_check_branch
        %155 = sbr.rel (%p153) target = $region28
      $region27: #{tpu_custom_call.1} parent=5 // pred_region
        // Predicated region
        $region29: #{tpu_custom_call.1} parent=27 // pred_check
          %p156 = pneg %p33
        $region30: #{tpu_custom_call.1} parent=27 // pred_check_branch
          %158 = sbr.rel (%p156) target = $region32
        $region31: #{tpu_custom_call.1} parent=27 // pred_region
          %p159 = scmp.lt.s32.totalorder %s13, 1
          %s160 = scalar_select %p159, %s13, 1
          %s161 = smul.addr %s160, 2
          %s162 = smul.addr %s161, 4
          %s163 = scalar_lea.vmem %s0, %s162
        $region32: #{tpu_custom_call.1} parent=27 // pred_fallthru
          _
      $region28: #{tpu_custom_call.1} parent=5 // pred_fallthru
        _
      %p164 = scmp.le.s32.totalorder 1, %s13
      %p165 = scmp.lt.s32.totalorder %s13, 3
      %p166 = pnand %p164, %p165
      %p167 = pneg %p166
      // Predicated region
      $region33: #{tpu_custom_call.1} parent=5 // pred_check
        _
      $region34: #{tpu_custom_call.1} parent=5 // pred_check_branch
        %169 = sbr.rel (%p166) target = $region36
      $region35: #{tpu_custom_call.1} parent=5 // pred_region
        %s170 = ssub.s32 %s13, 1
        %p171 = scmp.lt.s32.totalorder %s18, 1
        %s172 = scalar_select %p171, %s18, 1
        %s173 = smul.addr %s172, 2
        %s174 = smul.addr %s173, 4
        %s175 = scalar_lea.vmem %s0, %s174
        %p176 = pneg %p39
        %p177 = pneg %p36
        %p178 = pneg %p60
        %p179 = pneg %p57
        %p180 = pneg %p81
        %p181 = pneg %p78
        %p182 = pneg %p102
        %p183 = pneg %p99
        %p184 = pneg %p128
        %p185 = pneg %p125
        %s186 = sand.u32 %s115, 1
        %s187 = scalar_lea.sflag [#allocation4], %s186
        %s188 = sand.u32 %s115, 1
        %s189 = smul.addr %s188, 16
        %s190 = scalar_lea.vmem [#allocation3], %s189
        %p191 = scmp.lt.s32.totalorder %s18, 1
        %s192 = scalar_select %p191, %s18, 1
        %s193 = smul.addr %s192, 2
        %s194 = smul.addr %s193, 4
        %s195 = scalar_lea.vmem %s0, %s194
        %v197 = vld [vmem:[%s195] sm:$0xf]
        %v198 = vld [vmem:[%s195 + $0x4] sm:$0xf]
        %v201 = vunpack.c.l.b16 %v197
        %v202 = vunpack.c.l.b16 %v198
        %v203 = vpack.c.b16 %v202, %v201
        %v205 = vshrl.u32 %v203, 16
        %v207 = vrot.slane %v205, 7
        %v208 = vshll.u32 %v203, 16
        %v210 = vor.u32 %v207, %v208
        %vm212 = vcmask 1040384
        %vm213 = vsmask.f32 256
        %vm214 = vmand %vm212, %vm213
        %v215 = vsel %vm214, 0, %v210
        %v216 = vrot.slane %v208, 1
        %v217 = vor.u32 %v205, %v216
        %vm219 = vcmask 1047552
        %vm220 = vsmask.f32 7424
        %vm221 = vmand %vm219, %vm220
        %v222 = vsel %vm221, %v217, 0
        %223 = vrot.lane.b32.xlu0 %v203, 4
        %v224 = vpop.permute.xlu0 %223
        %226 = vrot.lane.b32.xlu0 %v222, 8
        %v227 = vpop.permute.xlu0 %226
        %vm228 = vcmask 31744
        %v231 = vsel %vm228, %v215, %v224
        %vm232 = vcmask 64512
        %v234 = vsel %vm232, %v231, %v227
        %v235 = vld [vmem:[%s1] sm:$0xf]
        %v236 = vld [vmem:[%s1 + $0x4] sm:$0x3]
        %v239 = vunpack.c.l.b16 %v235
        %v240 = vunpack.c.l.b16 %v236
        %v241 = vpack.c.b16 %v240, %v239
        %vm242 = vcmask 97280
        %v243 = vsel %vm242, %v234, 0
        %vm245 = vcmask 1045504
        %v247 = vsel %vm245, %v241, 0
        %249 = vmatprep.subr.bf16.mxu0 0
        %250 = vmatpush1.bf16.msra.mxu0 0
        %251 = vmatprep.subr.bf16.mxu0 0
        %252 = vmatpush1.bf16.msra.mxu0 0
        %253 = vmatprep.subr.bf16.mxu0 0
        %254 = vmatpush1.bf16.msra.mxu0 0
        %255 = vmatprep.subr.bf16.mxu0 0
        %256 = vmatpush1.bf16.msra.mxu0 0
        %257 = vmatprep.subr.bf16.mxu0 0
        %258 = vmatpush1.bf16.msra.mxu0 0
        %259 = vmatprep.subr.bf16.mxu0 0
        %260 = vmatpush1.bf16.msra.mxu0 0
        %261 = vmatprep.subr.bf16.mxu0 0
        %262 = vmatpush1.bf16.msra.mxu0 0
        %263 = vmatprep.subr.bf16.mxu0 0
        %264 = vmatpush1.bf16.msra.mxu0 %v247
        %265 = vmatprep.subr.bf16.mxu0 0
        %266 = vmatpush2.bf16.msra.mxu0 0
        %267 = vmatprep.subr.bf16.mxu0 0
        %268 = vmatpush2.bf16.msra.mxu0 0
        %269 = vmatprep.subr.bf16.mxu0 0
        %270 = vmatpush2.bf16.msra.mxu0 0
        %271 = vmatprep.subr.bf16.mxu0 0
        %272 = vmatpush2.bf16.msra.mxu0 0
        %273 = vmatprep.subr.bf16.mxu0 0
        %274 = vmatpush2.bf16.msra.mxu0 0
        %275 = vmatprep.subr.bf16.mxu0 0
        %276 = vmatpush2.bf16.msra.mxu0 0
        %277 = vmatprep.subr.bf16.mxu0 0
        %278 = vmatpush2.bf16.msra.mxu0 0
        %279 = vmatprep.subr.bf16.mxu0 0
        %280 = vmatpush2.bf16.msra.mxu0 0
        %281 = vmatprep.mubr.bf16.mxu0 0
        %282 = vmatmul.mubr.bf16.gmra.mxu0 %v243
        %v283 = vpop.f32.mrf.mxu0
        %v284 = vadd.f32 0.0, %v283
        %v285 = vpop.f32.mrf.mxu0
        %v286 = vpop.f32.mrf.mxu0
        %v287 = vadd.f32 0.0, %v286
        %v288 = vpop.f32.mrf.mxu0
        %289 = vdwg.mxu0
        %v290 = vsel %vm232, %v284, 0.0
        %291 = vadd.xlane.f32.xlu0 %v290
        %v292 = vpop.xlane.xlu0 %291
        %v293 = vsel %vm232, %v287, 0.0
        %294 = vadd.xlane.f32.xlu0 %v293
        %v295 = vpop.xlane.xlu0 %294
        %v296 = vrcp.pop 8.0
        %v297 = vmul.f32 %v292, %v296
        %v298 = vmul.f32 %v295, %v296
        %v299 = vsub.f32 %v284, %v297
        %v300 = vsub.f32 %v287, %v298
        %v301 = vmul.f32 %v299, %v299
        %v302 = vmul.f32 %v300, %v300
        %v303 = vsel %vm232, %v301, 0.0
        %304 = vadd.xlane.f32.xlu0 %v303
        %v305 = vpop.xlane.xlu0 %304
        %v306 = vsel %vm232, %v302, 0.0
        %307 = vadd.xlane.f32.xlu0 %v306
        %v308 = vpop.xlane.xlu0 %307
        %v309 = vmul.f32 %v305, %v296
        %v310 = vmul.f32 %v308, %v296
        %v311 = vadd.f32 %v309, 1e-05
        %v312 = vadd.f32 %v310, 1e-05
        %v313 = vrsqrt.pop %v311
        %v314 = vrsqrt.pop %v312
        %v315 = vmul.f32 %v299, %v313
        %v316 = vmul.f32 %v300, %v314
        %v317 = vld [vmem:[%s2] sm:$0x1]
        %v319 = vlaneseq
        %v320 = vshrl.u32 %v319, 7
        %v321 = vsub.s32 0, %v320
        %v322 = vrot.slane %v317, %v321
        %v324 = vmul.f32 %v315, %v322
        %v325 = vmul.f32 %v316, %v322
        %v326 = vld [vmem:[%s3] sm:$0x1]
        %v328 = vlaneseq
        %v329 = vshrl.u32 %v328, 7
        %v330 = vsub.s32 0, %v329
        %v331 = vrot.slane %v326, %v330
        %v333 = vadd.f32 %v324, %v331
        %v334 = vadd.f32 %v325, %v331
        %v335 = vmul.f32 %v333, 0.5
        %v336 = vmul.f32 %v334, 0.5
        %v337 = vmul.f32 %v333, 0.70710677
        %v338 = vmul.f32 %v334, 0.70710677
        %v339 = verf.f32.pop %v337
        %v340 = verf.f32.pop %v338
        %v341 = vadd.f32 %v339, 1.0
        %v342 = vadd.f32 %v340, 1.0
        %v343 = vmul.f32 %v335, %v341
        %v344 = vmul.f32 %v336, %v342
        %345 = vst.msk [vmem:[#allocation2] sm:$0xff] %vm232, %v343
        %346 = vst.msk [vmem:[#allocation2 + $0x8] sm:$0xff] %vm232, %v344
        %v347 = vld [vmem:[#allocation2] ss:$2 sm:$0xff]
        %s348 = scalar_lea.vmem [#allocation2], 1
        %v349 = vld [vmem:[%s348] ss:$2 sm:$0xff]
        %v350 = vmax.f32 %v347, %v349
        %v352 = vrot.slane %v350, 7
        %vm354 = vcmask 1040384
        %v355 = vsel %vm354, %v350, %v352
        %v356 = vrot.slane %v350, 1
        %vm358 = vcmask 1046528
        %v359 = vsel %vm358, %v356, %v350
        %v360 = vmul.f32 %v355, 0.25
        %v361 = vmul.f32 %v350, 0.75
        %v362 = vadd.f32 %v360, %v361
        %363 = vst.msk [vmem:[%s190] sm:$0xff] %vm232, %v362
        %v364 = vmul.f32 %v359, 0.25
        %v365 = vadd.f32 %v361, %v364
        %s366 = scalar_lea.vmem %s190, 8 [#allocation3]
        %367 = vst.msk [vmem:[%s366] sm:$0xff] %vm232, %v365
        %s368 = sand.u32 %s115, 1
        %s369 = scalar_lea.sflag [#allocation4], %s368
        %s370 = sand.u32 %s115, 1
        %s371 = smul.addr %s370, 16
        %s372 = scalar_lea.vmem [#allocation3], %s371
        // Predicated region
        $region37: #{tpu_custom_call.1} parent=35 // pred_check
          %p373 = pneg %p125
        $region38: #{tpu_custom_call.1} parent=35 // pred_check_branch
          %375 = sbr.rel (%p373) target = $region40
        $region39: #{tpu_custom_call.1} parent=35 // pred_region
          %s377 = ssub.s32 256, 256
          %378 = vsyncadd %s369, %s377
          %s379 = smul.addr %s18, 2
          %s380 = smul.addr %s379, 128
          %s381 = scalar_lea.hbm %s4, %s380
          %s382 = sshll.u32 %s372, 4
          %s383 = int_to_ptr.vmem [resolvable:$true] %s382
          %388 = dma.vmem_to_hbm [thread:$0]  %s383, 256, %s381, %s369, 128, 128, 8
        $region40: #{tpu_custom_call.1} parent=35 // pred_fallthru
          _
      $region36: #{tpu_custom_call.1} parent=5 // pred_fallthru
        _
      %p389 = scmp.le.s32.totalorder 2, %s13
      // Predicated region
      $region41: #{tpu_custom_call.1} parent=5 // pred_check
        %p390 = pneg %p389
      $region42: #{tpu_custom_call.1} parent=5 // pred_check_branch
        %392 = sbr.rel (%p390) target = $region44
      $region43: #{tpu_custom_call.1} parent=5 // pred_region
        %s393 = ssub.s32 %s13, 2
        // Predicated region
        $region45: #{tpu_custom_call.1} parent=43 // pred_check
          %p394 = pneg %p131
        $region46: #{tpu_custom_call.1} parent=43 // pred_check_branch
          %396 = sbr.rel (%p394) target = $region48
        $region47: #{tpu_custom_call.1} parent=43 // pred_region
          %s397 = sand.u32 %s116, 1
          %s398 = scalar_lea.sflag [#allocation4], %s397
          %s399 = sand.u32 %s116, 1
          %s400 = smul.addr %s399, 16
          %s401 = scalar_lea.vmem [#allocation3], %s400
          %402 = dma.done %s398, 256
        $region48: #{tpu_custom_call.1} parent=43 // pred_fallthru
          _
      $region44: #{tpu_custom_call.1} parent=5 // pred_fallthru
        _
    $region6: #{tpu_custom_call.1} parent=1 // loop_footer
      %s17 = sadd.s32 1, %s13
    $region7: #{tpu_custom_call.1} parent=1 // loop_footer_branch
      %12 = sbr.rel target = $region3
    $region8: #{tpu_custom_call.1} parent=1 // loop_exit
      _
    %403 = vsyncpa [#allocation4], 1
    %s404 = scalar_lea.sflag [#allocation4], 1
    %405 = vsyncpa %s404, 1

</llo_original>
